<compile_context>
chip_gen: v5e
topology: v5e:2x2
jax: 0.10.0
libtpu: 0.0.40
codegen_flags: <defaults>
</compile_context>

<pallas_src>
import functools

import jax
import jax.numpy as jnp
from jax import lax
from jax.experimental import pallas as pl
from jax.experimental.pallas import tpu as pltpu


def _round_up(n, m):
    return ((n + m - 1) // m) * m


def _mmd_kernel(xi_ref, xj_ref, yi_ref, yj_ref, out_ref, acc_ref, *,
                alpha, n_valid, tile, need_mask):
    i = pl.program_id(0)
    j = pl.program_id(1)

    @pl.when(jnp.logical_and(i == 0, j == 0))
    def _init():
        acc_ref[...] = jnp.zeros_like(acc_ref)

    # Row / column blocks.  Keep native dtype for the MXU contraction; do the
    # norm / distance math in f32 on the VPU.
    xi = xi_ref[...]
    xj = xj_ref[...]
    yi = yi_ref[...]
    yj = yj_ref[...]

    xi32 = xi.astype(jnp.float32)
    xj32 = xj.astype(jnp.float32)
    yi32 = yi.astype(jnp.float32)
    yj32 = yj.astype(jnp.float32)

    # Row norms replace the diag() extraction of the reference.
    dxi = jnp.sum(xi32 * xi32, axis=1, keepdims=True)      # (tm, 1)
    dyi = jnp.sum(yi32 * yi32, axis=1, keepdims=True)      # (tm, 1)
    dxj = jnp.sum(xj32 * xj32, axis=1, keepdims=True).T    # (1, tn)
    dyj = jnp.sum(yj32 * yj32, axis=1, keepdims=True).T    # (1, tn)

    if need_mask:
        rows = i * tile + lax.broadcasted_iota(jnp.int32, (tile, tile), 0)
        cols = j * tile + lax.broadcasted_iota(jnp.int32, (tile, tile), 1)
        mask = jnp.logical_and(rows < n_valid, cols < n_valid)
    else:
        mask = None

    # Contract the feature (last) dims directly -- no operand transposes.
    dn = (((1,), (1,)), ((), ()))

    def rbf_sum(a, b, da_col, db_row):
        gram = lax.dot_general(a, b, dn, preferred_element_type=jnp.float32)
        k = jnp.exp(-alpha * (da_col + db_row - 2.0 * gram))
        if mask is not None:
            k = jnp.where(mask, k, 0.0)
        return jnp.sum(k, keepdims=True)                    # (1, 1)

    # Sequential compute-and-reduce keeps only ~one (tile, tile) tile live.
    s_k = rbf_sum(xi, xj, dxi, dxj)   # exp(-a * ||x_i - x_j||^2)
    s_l = rbf_sum(yi, yj, dyi, dyj)   # exp(-a * ||y_i - y_j||^2)
    s_p = rbf_sum(xi, yj, dxi, dyj)   # exp(-a * ||x_i - y_j||^2)

    beta = 1.0 / (n_valid * (n_valid - 1))
    gamma = 2.0 / (n_valid * n_valid)
    acc_ref[...] += beta * (s_k + s_l) - gamma * s_p

    @pl.when(jnp.logical_and(i == pl.num_programs(0) - 1,
                             j == pl.num_programs(1) - 1))
    def _finalize():
        out_ref[...] = acc_ref[...]


def mmd_loss(x, y, alpha=1.0, max_tile=256):
    """Pallas TPU implementation of MMDLoss.forward(x, y). Returns a scalar."""
    assert x.shape == y.shape and x.ndim == 2
    B, D = x.shape

    # Tile sized for the smallest VMEM budget (v7x, 64 MiB): <= 256-row blocks.
    tile = min(max_tile, _round_up(B, 8))
    Bp = _round_up(B, tile)
    if Bp != B:
        pad = ((0, Bp - B), (0, 0))
        x = jnp.pad(x, pad)
        y = jnp.pad(y, pad)
    n_blocks = Bp // tile
    grid = (n_blocks, n_blocks)

    kernel = functools.partial(
        _mmd_kernel, alpha=float(alpha), n_valid=B, tile=tile,
        need_mask=(Bp != B))

    itemsize = jnp.dtype(x.dtype).itemsize
    cost = pl.CostEstimate(
        flops=6 * Bp * Bp * D,                       # three BxB Grams
        transcendentals=3 * Bp * Bp,                 # three BxB exps
        bytes_accessed=2 * Bp * D * itemsize * n_blocks + 4,
    )

    out = pl.pallas_call(
        kernel,
        out_shape=jax.ShapeDtypeStruct((1, 1), jnp.float32),
        grid_spec=pltpu.PrefetchScalarGridSpec(
            num_scalar_prefetch=0,
            grid=grid,
            in_specs=[
                pl.BlockSpec((tile, D), lambda i, j: (i, 0)),   # x row block
                pl.BlockSpec((tile, D), lambda i, j: (j, 0)),   # x col block
                pl.BlockSpec((tile, D), lambda i, j: (i, 0)),   # y row block
                pl.BlockSpec((tile, D), lambda i, j: (j, 0)),   # y col block
            ],
            out_specs=pl.BlockSpec((1, 1), lambda i, j: (0, 0)),
            scratch_shapes=[pltpu.VMEM((1, 1), jnp.float32)],
        ),
        compiler_params=pltpu.CompilerParams(
            # Scalar accumulator is shared across both grid axes -> both must
            # be 'arbitrary' (sequential) for correctness.
            dimension_semantics=("arbitrary", "arbitrary"),
            vmem_limit_bytes=64 * 1024 * 1024,
        ),
        cost_estimate=cost,
    )(x, x, y, y)
    return out[0, 0]


def mmd_loss_ref(x, y, alpha=1.0):
    """Pure-JAX reference mirroring the PyTorch forward."""
    x = x.astype(jnp.float32)
    y = y.astype(jnp.float32)
    B = x.shape[0]
    xx, yy, zz = x @ x.T, y @ y.T, x @ y.T
    rx = jnp.broadcast_to(jnp.diag(xx)[None, :], xx.shape)
    ry = jnp.broadcast_to(jnp.diag(yy)[None, :], yy.shape)
    K = jnp.exp(-alpha * (rx.T + rx - 2 * xx))
    L = jnp.exp(-alpha * (ry.T + ry - 2 * yy))
    P = jnp.exp(-alpha * (rx.T + ry - 2 * zz))
    beta = 1.0 / (B * (B - 1))
    gamma = 2.0 / (B * B)
    return beta * (jnp.sum(K) + jnp.sum(L)) - gamma * jnp.sum(P)


if __name__ == "__main__":
    key = jax.random.PRNGKey(0)
    kx, ky = jax.random.split(key)

    # Small shape consistent with the module: batch=8 samples, 32-dim features.
    B, D = 8, 32
    x = jax.random.normal(kx, (B, D), dtype=jnp.float32)
    y = jax.random.normal(ky, (B, D), dtype=jnp.float32) * 0.5 + 0.3

    out = jax.block_until_ready(mmd_loss(x, y, alpha=1.0))
    ref = jax.block_until_ready(mmd_loss_ref(x, y, alpha=1.0))
    assert jnp.allclose(out, ref, atol=1e-5, rtol=1e-5), (out, ref)

    # Exercise the tiled + padded/masked path (multi-step grid with accumulator).
    B2, D2 = 37, 64
    x2 = jax.random.normal(kx, (B2, D2), dtype=jnp.float32)
    y2 = jax.random.normal(ky, (B2, D2), dtype=jnp.float32) * 0.7 - 0.1
    out2 = jax.block_until_ready(mmd_loss(x2, y2, alpha=0.5, max_tile=16))
    ref2 = jax.block_until_ready(mmd_loss_ref(x2, y2, alpha=0.5))
    assert jnp.allclose(out2, ref2, atol=1e-4, rtol=1e-4), (out2, ref2)

    print("KERNEL_OK")
</pallas_src>

<mosaic_0001>
module attributes {stable_mosaic.version = 11 : i64} {
  func.func @_mmd_kernel(%arg0: i32, %arg1: i32, %arg2: memref<8x32xf32, #tpu.memory_space<vmem>>, %arg3: memref<8x32xf32, #tpu.memory_space<vmem>>, %arg4: memref<8x32xf32, #tpu.memory_space<vmem>>, %arg5: memref<8x32xf32, #tpu.memory_space<vmem>>, %arg6: memref<1x1xf32, #tpu.memory_space<vmem>>, %arg7: memref<1x1xf32, #tpu.memory_space<vmem>>) attributes {dimension_semantics = [#tpu.dimension_semantics<arbitrary>, #tpu.dimension_semantics<arbitrary>], iteration_bounds = array<i64: 1, 1>, scalar_prefetch = 0 : i64, scratch_operands = 1 : i64, tpu.core_type = #tpu.core_type<tc>, window_params = [{transform_indices = @transform_0, window_bounds = array<i64: 8, 32>}, {transform_indices = @transform_1, window_bounds = array<i64: 8, 32>}, {transform_indices = @transform_2, window_bounds = array<i64: 8, 32>}, {transform_indices = @transform_3, window_bounds = array<i64: 8, 32>}, {pipeline_mode = #tpu.pipeline_mode<synchronous>, transform_indices = @transform_4, window_bounds = array<i64: 1, 1>}]} {
    %c0_i32 = arith.constant 0 : i32
    %0 = arith.cmpi eq, %arg0, %c0_i32 : i32
    %c0_i32_0 = arith.constant 0 : i32
    %1 = arith.cmpi eq, %arg1, %c0_i32_0 : i32
    %2 = arith.andi %0, %1 : i1
    %3 = arith.extui %2 : i1 to i32
    %c0_i32_1 = arith.constant 0 : i32
    %4 = arith.cmpi ne, %3, %c0_i32_1 : i32
    scf.if %4 {
      %cst_33 = arith.constant 0.000000e+00 : f32
      %82 = vector.broadcast %cst_33 : f32 to vector<1x1xf32>
      %c0_34 = arith.constant 0 : index
      %c0_35 = arith.constant 0 : index
      %83 = vector.load %arg7[%c0_34, %c0_35] : memref<1x1xf32, #tpu.memory_space<vmem>>, vector<1x1xf32>
      tpu.vector_store %arg7[%c0_34, %c0_35], %82 {strides = array<i32>} : memref<1x1xf32, #tpu.memory_space<vmem>>, vector<1x1xf32>,
    } else {
    }
    %c0 = arith.constant 0 : index
    %c0_2 = arith.constant 0 : index
    %5 = vector.load %arg2[%c0, %c0_2] : memref<8x32xf32, #tpu.memory_space<vmem>>, vector<8x32xf32>
    %c0_3 = arith.constant 0 : index
    %c0_4 = arith.constant 0 : index
    %6 = vector.load %arg3[%c0_3, %c0_4] : memref<8x32xf32, #tpu.memory_space<vmem>>, vector<8x32xf32>
    %c0_5 = arith.constant 0 : index
    %c0_6 = arith.constant 0 : index
    %7 = vector.load %arg4[%c0_5, %c0_6] : memref<8x32xf32, #tpu.memory_space<vmem>>, vector<8x32xf32>
    %c0_7 = arith.constant 0 : index
    %c0_8 = arith.constant 0 : index
    %8 = vector.load %arg5[%c0_7, %c0_8] : memref<8x32xf32, #tpu.memory_space<vmem>>, vector<8x32xf32>
    %9 = arith.mulf %5, %5 : vector<8x32xf32>
    %cst = arith.constant dense<0.000000e+00> : vector<8xf32>
    %10 = vector.multi_reduction <add>, %9, %cst [1] : vector<8x32xf32> to vector<8xf32>
    %11 = vector.shape_cast %10 : vector<8xf32> to vector<8x1xf32>
    %12 = arith.mulf %7, %7 : vector<8x32xf32>
    %cst_9 = arith.constant dense<0.000000e+00> : vector<8xf32>
    %13 = vector.multi_reduction <add>, %12, %cst_9 [1] : vector<8x32xf32> to vector<8xf32>
    %14 = vector.shape_cast %13 : vector<8xf32> to vector<8x1xf32>
    %15 = arith.mulf %6, %6 : vector<8x32xf32>
    %cst_10 = arith.constant dense<0.000000e+00> : vector<8xf32>
    %16 = vector.multi_reduction <add>, %15, %cst_10 [1] : vector<8x32xf32> to vector<8xf32>
    %17 = vector.shape_cast %16 : vector<8xf32> to vector<8x1xf32>
    %18 = tpu.transpose %17, [1, 0] : vector<8x1xf32> -> vector<1x8xf32>
    %19 = arith.mulf %8, %8 : vector<8x32xf32>
    %cst_11 = arith.constant dense<0.000000e+00> : vector<8xf32>
    %20 = vector.multi_reduction <add>, %19, %cst_11 [1] : vector<8x32xf32> to vector<8xf32>
    %21 = vector.shape_cast %20 : vector<8xf32> to vector<8x1xf32>
    %22 = tpu.transpose %21, [1, 0] : vector<8x1xf32> -> vector<1x8xf32>
    %cst_12 = arith.constant dense<0.000000e+00> : vector<8x8xf32>
    %23 = tpu.matmul %5, %6, %cst_12 {dimension_numbers = #tpu.dot_dimension_numbers<[1], [1], [0], [0], [0, 0, 1, 0], [], []>} : vector<8x32xf32>, vector<8x32xf32>, vector<8x8xf32> -> vector<8x8xf32>
    %24 = vector.broadcast %11 : vector<8x1xf32> to vector<8x8xf32>
    %25 = vector.broadcast %18 : vector<1x8xf32> to vector<8x8xf32>
    %26 = arith.addf %24, %25 : vector<8x8xf32>
    %cst_13 = arith.constant 2.000000e+00 : f32
    %27 = vector.broadcast %cst_13 : f32 to vector<8x8xf32>
    %28 = arith.mulf %27, %23 : vector<8x8xf32>
    %29 = arith.subf %26, %28 : vector<8x8xf32>
    %cst_14 = arith.constant -1.000000e+00 : f32
    %30 = vector.broadcast %cst_14 : f32 to vector<8x8xf32>
    %31 = arith.mulf %30, %29 : vector<8x8xf32>
    %32 = math.exp %31 : vector<8x8xf32>
    %33 = vector.shape_cast %32 : vector<8x8xf32> to vector<1x8x8xf32>
    %cst_15 = arith.constant dense<0.000000e+00> : vector<1xf32>
    %34 = vector.multi_reduction <add>, %33, %cst_15 [1, 2] : vector<1x8x8xf32> to vector<1xf32>
    %35 = vector.shape_cast %34 : vector<1xf32> to vector<1x1x1xf32>
    %36 = vector.extract %35[0, 0, 0] : f32 from vector<1x1x1xf32>
    %37 = vector.broadcast %36 : f32 to vector<1x1xf32>
    %cst_16 = arith.constant dense<0.000000e+00> : vector<8x8xf32>
    %38 = tpu.matmul %7, %8, %cst_16 {dimension_numbers = #tpu.dot_dimension_numbers<[1], [1], [0], [0], [0, 0, 1, 0], [], []>} : vector<8x32xf32>, vector<8x32xf32>, vector<8x8xf32> -> vector<8x8xf32>
    %39 = vector.broadcast %14 : vector<8x1xf32> to vector<8x8xf32>
    %40 = vector.broadcast %22 : vector<1x8xf32> to vector<8x8xf32>
    %41 = arith.addf %39, %40 : vector<8x8xf32>
    %cst_17 = arith.constant 2.000000e+00 : f32
    %42 = vector.broadcast %cst_17 : f32 to vector<8x8xf32>
    %43 = arith.mulf %42, %38 : vector<8x8xf32>
    %44 = arith.subf %41, %43 : vector<8x8xf32>
    %cst_18 = arith.constant -1.000000e+00 : f32
    %45 = vector.broadcast %cst_18 : f32 to vector<8x8xf32>
    %46 = arith.mulf %45, %44 : vector<8x8xf32>
    %47 = math.exp %46 : vector<8x8xf32>
    %48 = vector.shape_cast %47 : vector<8x8xf32> to vector<1x8x8xf32>
    %cst_19 = arith.constant dense<0.000000e+00> : vector<1xf32>
    %49 = vector.multi_reduction <add>, %48, %cst_19 [1, 2] : vector<1x8x8xf32> to vector<1xf32>
    %50 = vector.shape_cast %49 : vector<1xf32> to vector<1x1x1xf32>
    %51 = vector.extract %50[0, 0, 0] : f32 from vector<1x1x1xf32>
    %52 = vector.broadcast %51 : f32 to vector<1x1xf32>
    %cst_20 = arith.constant dense<0.000000e+00> : vector<8x8xf32>
    %53 = tpu.matmul %5, %8, %cst_20 {dimension_numbers = #tpu.dot_dimension_numbers<[1], [1], [0], [0], [0, 0, 1, 0], [], []>} : vector<8x32xf32>, vector<8x32xf32>, vector<8x8xf32> -> vector<8x8xf32>
    %54 = vector.broadcast %11 : vector<8x1xf32> to vector<8x8xf32>
    %55 = vector.broadcast %22 : vector<1x8xf32> to vector<8x8xf32>
    %56 = arith.addf %54, %55 : vector<8x8xf32>
    %cst_21 = arith.constant 2.000000e+00 : f32
    %57 = vector.broadcast %cst_21 : f32 to vector<8x8xf32>
    %58 = arith.mulf %57, %53 : vector<8x8xf32>
    %59 = arith.subf %56, %58 : vector<8x8xf32>
    %cst_22 = arith.constant -1.000000e+00 : f32
    %60 = vector.broadcast %cst_22 : f32 to vector<8x8xf32>
    %61 = arith.mulf %60, %59 : vector<8x8xf32>
    %62 = math.exp %61 : vector<8x8xf32>
    %63 = vector.shape_cast %62 : vector<8x8xf32> to vector<1x8x8xf32>
    %cst_23 = arith.constant dense<0.000000e+00> : vector<1xf32>
    %64 = vector.multi_reduction <add>, %63, %cst_23 [1, 2] : vector<1x8x8xf32> to vector<1xf32>
    %65 = vector.shape_cast %64 : vector<1xf32> to vector<1x1x1xf32>
    %66 = vector.extract %65[0, 0, 0] : f32 from vector<1x1x1xf32>
    %67 = vector.broadcast %66 : f32 to vector<1x1xf32>
    %c0_24 = arith.constant 0 : index
    %c0_25 = arith.constant 0 : index
    %68 = vector.load %arg7[%c0_24, %c0_25] : memref<1x1xf32, #tpu.memory_space<vmem>>, vector<1x1xf32>
    %69 = arith.addf %37, %52 : vector<1x1xf32>
    %cst_26 = arith.constant 0.0178571437 : f32
    %70 = vector.broadcast %cst_26 : f32 to vector<1x1xf32>
    %71 = arith.mulf %70, %69 : vector<1x1xf32>
    %cst_27 = arith.constant 3.125000e-02 : f32
    %72 = vector.broadcast %cst_27 : f32 to vector<1x1xf32>
    %73 = arith.mulf %72, %67 : vector<1x1xf32>
    %74 = arith.subf %71, %73 : vector<1x1xf32>
    %75 = arith.addf %68, %74 : vector<1x1xf32>
    %c0_28 = arith.constant 0 : index
    %c0_29 = arith.constant 0 : index
    %76 = vector.load %arg7[%c0_28, %c0_29] : memref<1x1xf32, #tpu.memory_space<vmem>>, vector<1x1xf32>
    tpu.vector_store %arg7[%c0_28, %c0_29], %75 {strides = array<i32>} : memref<1x1xf32, #tpu.memory_space<vmem>>, vector<1x1xf32>,
    %c0_i32_30 = arith.constant 0 : i32
    %77 = arith.cmpi eq, %arg0, %c0_i32_30 : i32
    %c0_i32_31 = arith.constant 0 : i32
    %78 = arith.cmpi eq, %arg1, %c0_i32_31 : i32
    %79 = arith.andi %77, %78 : i1
    %80 = arith.extui %79 : i1 to i32
    %c0_i32_32 = arith.constant 0 : i32
    %81 = arith.cmpi ne, %80, %c0_i32_32 : i32
    scf.if %81 {
      %c0_33 = arith.constant 0 : index
      %c0_34 = arith.constant 0 : index
      %82 = vector.load %arg7[%c0_33, %c0_34] : memref<1x1xf32, #tpu.memory_space<vmem>>, vector<1x1xf32>
      %c0_35 = arith.constant 0 : index
      %c0_36 = arith.constant 0 : index
      %83 = vector.load %arg6[%c0_35, %c0_36] : memref<1x1xf32, #tpu.memory_space<vmem>>, vector<1x1xf32>
      tpu.vector_store %arg6[%c0_35, %c0_36], %82 {strides = array<i32>} : memref<1x1xf32, #tpu.memory_space<vmem>>, vector<1x1xf32>,
    } else {
    }
    return
  }
  func.func @transform_0(%arg0: i32, %arg1: i32) -> (i32, i32) {
    %c0_i32 = arith.constant 0 : i32
    %c0_i32_0 = arith.constant 0 : i32
    return %arg0, %c0_i32 : i32, i32
  }
  func.func @transform_1(%arg0: i32, %arg1: i32) -> (i32, i32) {
    %c0_i32 = arith.constant 0 : i32
    %c0_i32_0 = arith.constant 0 : i32
    return %arg1, %c0_i32 : i32, i32
  }
  func.func @transform_2(%arg0: i32, %arg1: i32) -> (i32, i32) {
    %c0_i32 = arith.constant 0 : i32
    %c0_i32_0 = arith.constant 0 : i32
    return %arg0, %c0_i32 : i32, i32
  }
  func.func @transform_3(%arg0: i32, %arg1: i32) -> (i32, i32) {
    %c0_i32 = arith.constant 0 : i32
    %c0_i32_0 = arith.constant 0 : i32
    return %arg1, %c0_i32 : i32, i32
  }
  func.func @transform_4(%arg0: i32, %arg1: i32) -> (i32, i32) {
    %c0_i32 = arith.constant 0 : i32
    %c0_i32_0 = arith.constant 0 : i32
    %c0_i32_1 = arith.constant 0 : i32
    return %c0_i32, %c0_i32_0 : i32, i32
  }
}

</mosaic_0001>

<llo_original>
// kernel: tpu_custom_call.1
$region0: #{tpu_custom_call.1}
  #allocation0 [shape = 'u32[]', space=smem, size = 0x4, offset = 0x4, fixed_abs, tag = 'smem constant byte address 0x4 - core index']
  #allocation1 [shape = 'u32[72,128]{1,0:T(1,128)}', space=vmem, size = 0x9000, scoped, tag = 'internal scratch']
  #allocation2 [shape = 'f32[1,1]{1,0:T(1,128)}', space=vmem, size = 0x200, scoped, tag = 'scratch operand']
  %s0 = inlined_call_operand.hbm [shape: f32[8,32], index: 0, kind: input, shape index: {}]
  %s1 = inlined_call_operand.hbm [shape: f32[8,32], index: 1, kind: input, shape index: {}]
  %s2 = inlined_call_operand.hbm [shape: f32[8,32], index: 2, kind: input, shape index: {}]
  %s3 = inlined_call_operand.hbm [shape: f32[8,32], index: 3, kind: input, shape index: {}]
  %s4 = inlined_call_operand.hbm [shape: f32[1,1], index: 4, kind: output, shape index: {}]
  %s5 = sld [smem:[#allocation0]]
  $region50: #{tpu_custom_call.1} parent=0
    _
  %s7 = ssub.s32 1, %s5
  %s8 = scalar_select 0, %s7, %s5
  $region1: #{tpu_custom_call.1} parent=0
    #allocation3 [shape = 'u8[4096]{0}', space=vmem, size = 0x1000, scoped, tag = 'input window, operand 0, single buffered']
    #allocation4 [shape = 's32[1]{0}', space=sflag, size = 0x4, scoped, tag = 'scoped memory for tpu_custom_call.1']
    #allocation5 [shape = 's32[1]{0}', space=sflag, size = 0x4, scoped, tag = 'scoped memory for tpu_custom_call.1']
    #allocation6 [shape = 'u8[4096]{0}', space=vmem, size = 0x1000, scoped, tag = 'input window, operand 1, single buffered']
    #allocation7 [shape = 's32[1]{0}', space=sflag, size = 0x4, scoped, tag = 'scoped memory for tpu_custom_call.1']
    #allocation8 [shape = 'u8[4096]{0}', space=vmem, size = 0x1000, scoped, tag = 'input window, operand 2, single buffered']
    #allocation9 [shape = 'u8[4096]{0}', space=vmem, size = 0x1000, scoped, tag = 'input window, operand 3, single buffered']
    #allocation10 [shape = 's32[1]{0}', space=sflag, size = 0x4, scoped, tag = 'scoped memory for tpu_custom_call.1']
    #allocation11 [shape = 'u8[512]{0}', space=vmem, size = 0x400, scoped, tag = 'output window, operand 0, single buffered']
    %9 = vsyncpa [#allocation4], 0
    %10 = vsyncpa [#allocation7], 0
    %11 = vsyncpa [#allocation10], 0
    %12 = vsyncpa [#allocation5], 0
    // Predicated region
    $region2: #{tpu_custom_call.1} parent=1 // pred_check
      _
    $region3: #{tpu_custom_call.1} parent=1 // pred_check_branch
      %14 = sbr.rel (0) target = $region5
    $region4: #{tpu_custom_call.1} parent=1 // pred_region
      %16 = vsyncadd [#allocation4], 0
      %s18 = sshll.u32 %s0, 4
      %s19 = int_to_ptr.hbm [resolvable:$true] %s18
      %s20 = sshll.u32 [#allocation3], 4
      %s21 = int_to_ptr.vmem [resolvable:$true] %s20
      %23 = dma.hbm_to_vmem [thread:$0]  %s19, 128, %s21, [#allocation4]
    $region5: #{tpu_custom_call.1} parent=1 // pred_fallthru
      _
    // Predicated region
    $region6: #{tpu_custom_call.1} parent=1 // pred_check
      _
    $region7: #{tpu_custom_call.1} parent=1 // pred_check_branch
      %25 = sbr.rel (0) target = $region9
    $region8: #{tpu_custom_call.1} parent=1 // pred_region
      %27 = vsyncadd [#allocation7], 0
      %s29 = sshll.u32 %s1, 4
      %s30 = int_to_ptr.hbm [resolvable:$true] %s29
      %s31 = sshll.u32 [#allocation6], 4
      %s32 = int_to_ptr.vmem [resolvable:$true] %s31
      %34 = dma.hbm_to_vmem [thread:$0]  %s30, 128, %s32, [#allocation7]
    $region9: #{tpu_custom_call.1} parent=1 // pred_fallthru
      _
    // Predicated region
    $region10: #{tpu_custom_call.1} parent=1 // pred_check
      _
    $region11: #{tpu_custom_call.1} parent=1 // pred_check_branch
      %36 = sbr.rel (0) target = $region13
    $region12: #{tpu_custom_call.1} parent=1 // pred_region
      %38 = vsyncadd [#allocation7], 0
      %s40 = sshll.u32 %s2, 4
      %s41 = int_to_ptr.hbm [resolvable:$true] %s40
      %s42 = sshll.u32 [#allocation8], 4
      %s43 = int_to_ptr.vmem [resolvable:$true] %s42
      %45 = dma.hbm_to_vmem [thread:$0]  %s41, 128, %s43, [#allocation7]
    $region13: #{tpu_custom_call.1} parent=1 // pred_fallthru
      _
    // Predicated region
    $region14: #{tpu_custom_call.1} parent=1 // pred_check
      _
    $region15: #{tpu_custom_call.1} parent=1 // pred_check_branch
      %47 = sbr.rel (0) target = $region17
    $region16: #{tpu_custom_call.1} parent=1 // pred_region
      %49 = vsyncadd [#allocation10], 0
      %s51 = sshll.u32 %s3, 4
      %s52 = int_to_ptr.hbm [resolvable:$true] %s51
      %s53 = sshll.u32 [#allocation9], 4
      %s54 = int_to_ptr.vmem [resolvable:$true] %s53
      %56 = dma.hbm_to_vmem [thread:$0]  %s52, 128, %s54, [#allocation10]
    $region17: #{tpu_custom_call.1} parent=1 // pred_fallthru
      _
    // Predicated region
    $region18: #{tpu_custom_call.1} parent=1 // pred_check
      _
    $region19: #{tpu_custom_call.1} parent=1 // pred_check_branch
      %58 = sbr.rel (0) target = $region21
    $region20: #{tpu_custom_call.1} parent=1 // pred_region
      %60 = dma.done [#allocation4], 128
    $region21: #{tpu_custom_call.1} parent=1 // pred_fallthru
      _
    // Predicated region
    $region22: #{tpu_custom_call.1} parent=1 // pred_check
      _
    $region23: #{tpu_custom_call.1} parent=1 // pred_check_branch
      %62 = sbr.rel (0) target = $region25
    $region24: #{tpu_custom_call.1} parent=1 // pred_region
      %64 = dma.done [#allocation7], 128
    $region25: #{tpu_custom_call.1} parent=1 // pred_fallthru
      _
    // Predicated region
    $region26: #{tpu_custom_call.1} parent=1 // pred_check
      _
    $region27: #{tpu_custom_call.1} parent=1 // pred_check_branch
      %66 = sbr.rel (0) target = $region29
    $region28: #{tpu_custom_call.1} parent=1 // pred_region
      %68 = dma.done [#allocation7], 128
    $region29: #{tpu_custom_call.1} parent=1 // pred_fallthru
      _
    // Predicated region
    $region30: #{tpu_custom_call.1} parent=1 // pred_check
      _
    $region31: #{tpu_custom_call.1} parent=1 // pred_check_branch
      %70 = sbr.rel (0) target = $region33
    $region32: #{tpu_custom_call.1} parent=1 // pred_region
      %72 = dma.done [#allocation10], 128
    $region33: #{tpu_custom_call.1} parent=1 // pred_fallthru
      _
    %p73 = scmp.eq.s32.totalorder 0, 0
    %p74 = scmp.eq.s32.totalorder 0, 0
    %p75 = pnand %p73, %p74
    %p76 = pneg %p75
    // Predicated region
    $region34: #{tpu_custom_call.1} parent=1 // pred_check
      _
    $region35: #{tpu_custom_call.1} parent=1 // pred_check_branch
      %78 = sbr.rel (%p75) target = $region37
    $region36: #{tpu_custom_call.1} parent=1 // pred_region
      %vm79 = vcmask 0
      %80 = vst.msk [vmem:[#allocation2] sm:$0x1] %vm79, 0.0
    $region37: #{tpu_custom_call.1} parent=1 // pred_fallthru
      _
    %v81 = vld [vmem:[#allocation3] sm:$0xff]
    %v82 = vld [vmem:[#allocation6] sm:$0xff]
    %v83 = vld [vmem:[#allocation8] sm:$0xff]
    %v84 = vld [vmem:[#allocation9] sm:$0xff]
    %v85 = vmul.f32 %v81, %v81
    %vm86 = vcmask 261120
    %v87 = vsel %vm86, %v85, 0.0
    %88 = vadd.xlane.f32.xlu0 %v87
    %v89 = vpop.xlane.xlu0 %88
    %v90 = vmul.f32 %v83, %v83
    %v91 = vsel %vm86, %v90, 0.0
    %92 = vadd.xlane.f32.xlu0 %v91
    %v93 = vpop.xlane.xlu0 %92
    %v94 = vmul.f32 %v82, %v82
    %v95 = vsel %vm86, %v94, 0.0
    %96 = vadd.xlane.f32.xlu0 %v95
    %v97 = vpop.xlane.xlu0 %96
    %98 = vxpose.xlu0.b32.start [1/16] %v97, 128
    %99 = vxpose.xlu0.b32.cont [2/16] 0.0, 128
    %100 = vxpose.xlu0.b32.cont [3/16] 0.0, 128
    %101 = vxpose.xlu0.b32.cont [4/16] 0.0, 128
    %102 = vxpose.xlu0.b32.cont [5/16] 0.0, 128
    %103 = vxpose.xlu0.b32.cont [6/16] 0.0, 128
    %104 = vxpose.xlu0.b32.cont [7/16] 0.0, 128
    %105 = vxpose.xlu0.b32.cont [8/16] 0.0, 128
    %106 = vxpose.xlu0.b32.cont [9/16] 0.0, 128
    %107 = vxpose.xlu0.b32.cont [10/16] 0.0, 128
    %108 = vxpose.xlu0.b32.cont [11/16] 0.0, 128
    %109 = vxpose.xlu0.b32.cont [12/16] 0.0, 128
    %110 = vxpose.xlu0.b32.cont [13/16] 0.0, 128
    %111 = vxpose.xlu0.b32.cont [14/16] 0.0, 128
    %112 = vxpose.xlu0.b32.cont [15/16] 0.0, 128
    %113 = vxpose.xlu0.b32.end [16/16] 0.0, 128
    %v114 = vpop.trf.xlu0
    %v115 = vpop.trf.xlu0
    %v116 = vpop.trf.xlu0
    %v117 = vpop.trf.xlu0
    %v118 = vpop.trf.xlu0
    %v119 = vpop.trf.xlu0
    %v120 = vpop.trf.xlu0
    %v121 = vpop.trf.xlu0
    %v122 = vpop.trf.xlu0
    %v123 = vpop.trf.xlu0
    %v124 = vpop.trf.xlu0
    %v125 = vpop.trf.xlu0
    %v126 = vpop.trf.xlu0
    %v127 = vpop.trf.xlu0
    %v128 = vpop.trf.xlu0
    %v129 = vpop.trf.xlu0
    %v130 = vmul.f32 %v84, %v84
    %v131 = vsel %vm86, %v130, 0.0
    %132 = vadd.xlane.f32.xlu0 %v131
    %v133 = vpop.xlane.xlu0 %132
    %134 = vxpose.xlu0.b32.start [1/16] %v133, 128
    %135 = vxpose.xlu0.b32.cont [2/16] 0.0, 128
    %136 = vxpose.xlu0.b32.cont [3/16] 0.0, 128
    %137 = vxpose.xlu0.b32.cont [4/16] 0.0, 128
    %138 = vxpose.xlu0.b32.cont [5/16] 0.0, 128
    %139 = vxpose.xlu0.b32.cont [6/16] 0.0, 128
    %140 = vxpose.xlu0.b32.cont [7/16] 0.0, 128
    %141 = vxpose.xlu0.b32.cont [8/16] 0.0, 128
    %142 = vxpose.xlu0.b32.cont [9/16] 0.0, 128
    %143 = vxpose.xlu0.b32.cont [10/16] 0.0, 128
    %144 = vxpose.xlu0.b32.cont [11/16] 0.0, 128
    %145 = vxpose.xlu0.b32.cont [12/16] 0.0, 128
    %146 = vxpose.xlu0.b32.cont [13/16] 0.0, 128
    %147 = vxpose.xlu0.b32.cont [14/16] 0.0, 128
    %148 = vxpose.xlu0.b32.cont [15/16] 0.0, 128
    %149 = vxpose.xlu0.b32.end [16/16] 0.0, 128
    %v150 = vpop.trf.xlu0
    %v151 = vpop.trf.xlu0
    %v152 = vpop.trf.xlu0
    %v153 = vpop.trf.xlu0
    %v154 = vpop.trf.xlu0
    %v155 = vpop.trf.xlu0
    %v156 = vpop.trf.xlu0
    %v157 = vpop.trf.xlu0
    %v158 = vpop.trf.xlu0
    %v159 = vpop.trf.xlu0
    %v160 = vpop.trf.xlu0
    %v161 = vpop.trf.xlu0
    %v162 = vpop.trf.xlu0
    %v163 = vpop.trf.xlu0
    %v164 = vpop.trf.xlu0
    %v165 = vpop.trf.xlu0
    %v167 = vsel %vm86, %v81, 0
    %v170 = vsel %vm86, %v82, 0
    %172 = vmatpush.xpose.msra.mxu0 0.0
    %173 = vmatpush.xpose.msra.mxu0 0.0
    %174 = vmatpush.xpose.msra.mxu0 0.0
    %175 = vmatpush.xpose.msra.mxu0 0.0
    %176 = vmatpush.xpose.msra.mxu0 0.0
    %177 = vmatpush.xpose.msra.mxu0 0.0
    %178 = vmatpush.xpose.msra.mxu0 0.0
    %179 = vmatpush.xpose.msra.mxu0 0.0
    %180 = vmatpush.xpose.msra.mxu0 0.0
    %181 = vmatpush.xpose.msra.mxu0 0.0
    %182 = vmatpush.xpose.msra.mxu0 0.0
    %183 = vmatpush.xpose.msra.mxu0 0.0
    %184 = vmatpush.xpose.msra.mxu0 0.0
    %185 = vmatpush.xpose.msra.mxu0 0.0
    %186 = vmatpush.xpose.msra.mxu0 0.0
    %187 = vmatpush.xpose.msra.mxu0 %v170
    %188 = vmatmul.f32.gmra.mxu0 %v167
    %v189 = vpop.f32.mrf.mxu0
    %v190 = vadd.f32 0.0, %v189
    %191 = vdwg.mxu0
    %v192 = vperm.slane %v114, 0
    %v193 = vadd.f32 %v89, %v192
    %v194 = vmul.f32 %v190, 2.0
    %v195 = vsub.f32 %v193, %v194
    %v196 = vmul.f32 %v195, -1.0
    %v197 = vmul.f32 %v196, 1.442695
    %v198 = vpow.pop %v197
    %vm199 = vcmask 64512
    %v200 = vsel %vm199, %v198, 0.0
    %201 = vadd.xlane.f32.xlu0 %v200
    %v202 = vpop.xlane.xlu0 %201
    %v203 = vrot.slane %v202, 4
    %v204 = vadd.f32 %v202, %v203
    %v205 = vrot.slane %v204, 2
    %v206 = vadd.f32 %v204, %v205
    %v207 = vrot.slane %v206, 1
    %v208 = vadd.f32 %v206, %v207
    %s209 = vtos %v208
    %v210 = vstv %s209
    %v212 = vsel %vm86, %v83, 0
    %v215 = vsel %vm86, %v84, 0
    %217 = vmatpush.xpose.msra.mxu0 0.0
    %218 = vmatpush.xpose.msra.mxu0 0.0
    %219 = vmatpush.xpose.msra.mxu0 0.0
    %220 = vmatpush.xpose.msra.mxu0 0.0
    %221 = vmatpush.xpose.msra.mxu0 0.0
    %222 = vmatpush.xpose.msra.mxu0 0.0
    %223 = vmatpush.xpose.msra.mxu0 0.0
    %224 = vmatpush.xpose.msra.mxu0 0.0
    %225 = vmatpush.xpose.msra.mxu0 0.0
    %226 = vmatpush.xpose.msra.mxu0 0.0
    %227 = vmatpush.xpose.msra.mxu0 0.0
    %228 = vmatpush.xpose.msra.mxu0 0.0
    %229 = vmatpush.xpose.msra.mxu0 0.0
    %230 = vmatpush.xpose.msra.mxu0 0.0
    %231 = vmatpush.xpose.msra.mxu0 0.0
    %232 = vmatpush.xpose.msra.mxu0 %v215
    %233 = vmatmul.f32.gmra.mxu0 %v212
    %v234 = vpop.f32.mrf.mxu0
    %v235 = vadd.f32 0.0, %v234
    %236 = vdwg.mxu0
    %v237 = vperm.slane %v150, 0
    %v238 = vadd.f32 %v93, %v237
    %v239 = vmul.f32 %v235, 2.0
    %v240 = vsub.f32 %v238, %v239
    %v241 = vmul.f32 %v240, -1.0
    %v242 = vmul.f32 %v241, 1.442695
    %v243 = vpow.pop %v242
    %v244 = vsel %vm199, %v243, 0.0
    %245 = vadd.xlane.f32.xlu0 %v244
    %v246 = vpop.xlane.xlu0 %245
    %v247 = vrot.slane %v246, 4
    %v248 = vadd.f32 %v246, %v247
    %v249 = vrot.slane %v248, 2
    %v250 = vadd.f32 %v248, %v249
    %v251 = vrot.slane %v250, 1
    %v252 = vadd.f32 %v250, %v251
    %s253 = vtos %v252
    %v254 = vstv %s253
    %255 = vmatpush.xpose.msra.mxu0 0.0
    %256 = vmatpush.xpose.msra.mxu0 0.0
    %257 = vmatpush.xpose.msra.mxu0 0.0
    %258 = vmatpush.xpose.msra.mxu0 0.0
    %259 = vmatpush.xpose.msra.mxu0 0.0
    %260 = vmatpush.xpose.msra.mxu0 0.0
    %261 = vmatpush.xpose.msra.mxu0 0.0
    %262 = vmatpush.xpose.msra.mxu0 0.0
    %263 = vmatpush.xpose.msra.mxu0 0.0
    %264 = vmatpush.xpose.msra.mxu0 0.0
    %265 = vmatpush.xpose.msra.mxu0 0.0
    %266 = vmatpush.xpose.msra.mxu0 0.0
    %267 = vmatpush.xpose.msra.mxu0 0.0
    %268 = vmatpush.xpose.msra.mxu0 0.0
    %269 = vmatpush.xpose.msra.mxu0 0.0
    %270 = vmatpush.xpose.msra.mxu0 %v215
    %271 = vmatmul.f32.gmra.mxu0 %v167
    %v272 = vpop.f32.mrf.mxu0
    %v273 = vadd.f32 0.0, %v272
    %274 = vdwg.mxu0
    %v275 = vadd.f32 %v89, %v237
    %v276 = vmul.f32 %v273, 2.0
    %v277 = vsub.f32 %v275, %v276
    %v278 = vmul.f32 %v277, -1.0
    %v279 = vmul.f32 %v278, 1.442695
    %v280 = vpow.pop %v279
    %v281 = vsel %vm199, %v280, 0.0
    %282 = vadd.xlane.f32.xlu0 %v281
    %v283 = vpop.xlane.xlu0 %282
    %v284 = vrot.slane %v283, 4
    %v285 = vadd.f32 %v283, %v284
    %v286 = vrot.slane %v285, 2
    %v287 = vadd.f32 %v285, %v286
    %v288 = vrot.slane %v287, 1
    %v289 = vadd.f32 %v287, %v288
    %s290 = vtos %v289
    %v291 = vstv %s290
    %v292 = vld [vmem:[#allocation2] sm:$0x1]
    %v293 = vadd.f32 %v210, %v254
    %v294 = vmul.f32 %v293, 0.017857144
    %v295 = vmul.f32 %v291, 0.03125
    %v296 = vsub.f32 %v294, %v295
    %v297 = vadd.f32 %v292, %v296
    %vm298 = vcmask 0
    %299 = vst.msk [vmem:[#allocation2] sm:$0x1] %vm298, %v297
    // Predicated region
    $region38: #{tpu_custom_call.1} parent=1 // pred_check
      _
    $region39: #{tpu_custom_call.1} parent=1 // pred_check_branch
      %301 = sbr.rel (%p75) target = $region41
    $region40: #{tpu_custom_call.1} parent=1 // pred_region
      %v302 = vld [vmem:[#allocation2] sm:$0x1]
      %303 = vst.msk [vmem:[#allocation11] sm:$0x1] %vm298, %v302
    $region41: #{tpu_custom_call.1} parent=1 // pred_fallthru
      _
    // Predicated region
    $region42: #{tpu_custom_call.1} parent=1 // pred_check
      _
    $region43: #{tpu_custom_call.1} parent=1 // pred_check_branch
      %305 = sbr.rel (0) target = $region45
    $region44: #{tpu_custom_call.1} parent=1 // pred_region
      %307 = vsyncadd [#allocation5], 0
      %s309 = sshll.u32 [#allocation11], 4
      %s310 = int_to_ptr.vmem [resolvable:$true] %s309
      %s311 = sshll.u32 %s4, 4
      %s312 = int_to_ptr.hbm [resolvable:$true] %s311
      %314 = dma.vmem_to_hbm [thread:$0]  %s310, 16, %s312, [#allocation5]
    $region45: #{tpu_custom_call.1} parent=1 // pred_fallthru
      _
    // Predicated region
    $region46: #{tpu_custom_call.1} parent=1 // pred_check
      _
    $region47: #{tpu_custom_call.1} parent=1 // pred_check_branch
      %316 = sbr.rel (0) target = $region49
    $region48: #{tpu_custom_call.1} parent=1 // pred_region
      %318 = dma.done [#allocation5], 16
    $region49: #{tpu_custom_call.1} parent=1 // pred_fallthru
      _
    %319 = vsyncpa [#allocation4], 1
    %320 = vsyncpa [#allocation7], 1
    %321 = vsyncpa [#allocation10], 1
    %322 = vsyncpa [#allocation5], 1

</llo_original>
